<compile_context>
chip_gen: v7x
topology: tpu7x:2x2x1
jax: 0.10.0
libtpu: 0.0.40
codegen_flags: <defaults>
</compile_context>

<pallas_src>
import functools

import jax
import jax.numpy as jnp
from jax.experimental import pallas as pl
from jax.experimental.pallas import tpu as pltpu

_NEG_BIG = -1e30  # finite mask value; avoids -inf NaN pitfalls in the softmax


def _round_up(x, m):
    return (x + m - 1) // m * m


# --------------------------------------------------------------------------
# Kernel 1: per-node projection z = x @ W (all heads fused) + attention logits
# --------------------------------------------------------------------------
def _proj_kernel(x_ref, w_ref, al_ref, ar_ref, z_ref, el_ref, er_ref, *,
                 num_heads, out_feats):
    # One lane-wide MXU push for all heads (bf16 in, f32 accumulate).
    x = x_ref[...].astype(jnp.bfloat16)          # (TM, Fin)
    w = w_ref[...].astype(jnp.bfloat16)          # (Fin, H*D)
    z = jnp.dot(x, w, preferred_element_type=jnp.float32)   # (TM, H*D) f32
    z_ref[...] = z.astype(jnp.bfloat16)          # bf16 stream for kernel 2

    # Per-head attention logits as VPU multiply + lane reduction (no matmul,
    # no transpose).  el is the "source" term, er the "destination" term.
    for h in range(num_heads):
        lo = h * out_feats
        z_h = z[:, lo:lo + out_feats]                            # (TM, D)
        al_h = al_ref[h:h + 1, :]                                # (1, D)
        ar_h = ar_ref[h:h + 1, :]                                # (1, D)
        el_ref[:, h:h + 1] = jnp.sum(z_h * al_h, axis=1, keepdims=True)
        er_ref[:, h:h + 1] = jnp.sum(z_h * ar_h, axis=1, keepdims=True)


# --------------------------------------------------------------------------
# Kernel 2: flash-style masked edge-softmax + aggregation over source tiles
# --------------------------------------------------------------------------
def _attn_kernel(er_ref, elt_ref, z_ref, adj_ref, b_ref, out_ref,
                 m_sc, l_sc, acc_sc, *,
                 num_heads, out_feats, apply_elu, negative_slope):
    k = pl.program_id(1)

    @pl.when(k == 0)
    def _init():
        m_sc[...] = jnp.full_like(m_sc, _NEG_BIG)
        l_sc[...] = jnp.zeros_like(l_sc)
        acc_sc[...] = jnp.zeros_like(acc_sc)

    # Head-invariant additive edge mask, computed once per (dst, src) tile.
    mask_bias = jnp.where(adj_ref[...] != 0, 0.0, _NEG_BIG)     # (TM, TK) f32

    er = er_ref[...]           # (TM, H)  f32   (destination term)
    elt = elt_ref[...]         # (H, TK)  f32   (source term, pre-transposed)
    z = z_ref[...]             # (TK, H*D) bf16 (source features)

    for h in range(num_heads):                    # static unroll, H is small
        lo = h * out_feats
        hi = lo + out_feats
        e = er[:, h:h + 1] + elt[h:h + 1, :]                     # (TM, TK)
        e = jnp.where(e >= 0, e, negative_slope * e)             # LeakyReLU
        e = e + mask_bias                                        # edges only

        m_prev = m_sc[:, h:h + 1]                                # (TM, 1)
        m_new = jnp.maximum(m_prev, jnp.max(e, axis=1, keepdims=True))
        corr = jnp.exp(m_prev - m_new)
        p = jnp.exp(e - m_new)                                   # (TM, TK)
        l_sc[:, h:h + 1] = (corr * l_sc[:, h:h + 1]
                            + jnp.sum(p, axis=1, keepdims=True))
        # alpha never materialized: fold 1/l into the finalize step.
        acc_sc[:, lo:hi] = corr * acc_sc[:, lo:hi] + jnp.dot(
            p.astype(jnp.bfloat16), z[:, lo:hi],
            preferred_element_type=jnp.float32)
        m_sc[:, h:h + 1] = m_new

    @pl.when(k == pl.num_programs(1) - 1)
    def _finalize():
        safe_l = jnp.maximum(l_sc[...], 1e-30)                   # (TM, H)
        inv_l = pl.reciprocal(safe_l, approx=True)               # EUP slot
        pieces = [acc_sc[:, h * out_feats:(h + 1) * out_feats]
                  * inv_l[:, h:h + 1] for h in range(num_heads)]
        out = jnp.concatenate(pieces, axis=1) + b_ref[...]       # (TM, H*D)
        if apply_elu:
            out = jnp.where(out > 0, out, jnp.exp(out) - 1.0)
        out_ref[...] = out                        # single lane-dense store


# --------------------------------------------------------------------------
# One GATConv layer (feat_drop = attn_drop = 0, no residual) with Pallas.
# --------------------------------------------------------------------------
def gat_conv_pallas(x, w, attn_l, attn_r, bias, adj_i8, *, num_heads,
                    out_feats, apply_elu, negative_slope=0.2,
                    tile_m=128, tile_k=128):
    n, fin = x.shape
    hd = num_heads * out_feats
    npad = _round_up(max(n, 1), max(tile_m, tile_k))

    x_p = jnp.pad(x, ((0, npad - n), (0, 0)))
    adj_p = jnp.pad(adj_i8, ((0, npad - n), (0, npad - n)))

    vmem_limit = 32 * 1024 * 1024   # safe on v5e/v6e (128 MiB) and v7x (64 MiB)

    # ---- kernel 1: projection + attention logits -------------------------
    proj = functools.partial(_proj_kernel, num_heads=num_heads,
                             out_feats=out_feats)
    z, el, er = pl.pallas_call(
        proj,
        out_shape=(
            jax.ShapeDtypeStruct((npad, hd), jnp.bfloat16),
            jax.ShapeDtypeStruct((npad, num_heads), jnp.float32),
            jax.ShapeDtypeStruct((npad, num_heads), jnp.float32),
        ),
        grid_spec=pltpu.PrefetchScalarGridSpec(
            num_scalar_prefetch=0,
            grid=(npad // tile_m,),
            in_specs=[
                pl.BlockSpec((tile_m, fin), lambda i: (i, 0)),
                pl.BlockSpec((fin, hd), lambda i: (0, 0)),           # resident
                pl.BlockSpec((num_heads, out_feats), lambda i: (0, 0)),
                pl.BlockSpec((num_heads, out_feats), lambda i: (0, 0)),
            ],
            out_specs=[
                pl.BlockSpec((tile_m, hd), lambda i: (i, 0)),
                pl.BlockSpec((tile_m, num_heads), lambda i: (i, 0)),
                pl.BlockSpec((tile_m, num_heads), lambda i: (i, 0)),
            ],
        ),
        compiler_params=pltpu.CompilerParams(
            dimension_semantics=("parallel",),
            vmem_limit_bytes=vmem_limit),
    )(x_p, w, attn_l, attn_r)

    # Tiny (N, H) -> (H, N) layout plumbing in the wrapper so kernel 2 gets a
    # lane-major source-logit row per head (no in-kernel transposes).
    el_t = jnp.transpose(el)                    # (H, Npad)
    b_flat = bias.reshape(1, hd)

    # ---- kernel 2: flash-style masked softmax + aggregation --------------
    attn = functools.partial(_attn_kernel, num_heads=num_heads,
                             out_feats=out_feats, apply_elu=apply_elu,
                             negative_slope=negative_slope)
    out = pl.pallas_call(
        attn,
        out_shape=jax.ShapeDtypeStruct((npad, hd), jnp.float32),
        grid_spec=pltpu.PrefetchScalarGridSpec(
            num_scalar_prefetch=0,
            grid=(npad // tile_m, npad // tile_k),
            in_specs=[
                pl.BlockSpec((tile_m, num_heads), lambda i, k: (i, 0)),   # er
                pl.BlockSpec((num_heads, tile_k), lambda i, k: (0, k)),   # el^T
                pl.BlockSpec((tile_k, hd), lambda i, k: (k, 0)),          # z src
                pl.BlockSpec((tile_m, tile_k), lambda i, k: (i, k)),      # adj
                pl.BlockSpec((1, hd), lambda i, k: (0, 0)),               # bias
            ],
            out_specs=pl.BlockSpec((tile_m, hd), lambda i, k: (i, 0)),
            scratch_shapes=[
                pltpu.VMEM((tile_m, num_heads), jnp.float32),   # running max
                pltpu.VMEM((tile_m, num_heads), jnp.float32),   # running sum
                pltpu.VMEM((tile_m, hd), jnp.float32),          # accumulator
            ],
        ),
        compiler_params=pltpu.CompilerParams(
            dimension_semantics=("parallel", "arbitrary"),
            vmem_limit_bytes=vmem_limit),
    )(er, el_t, z, adj_p, b_flat)

    return out[:n]


# --------------------------------------------------------------------------
# Pure-JAX reference (mirrors DGL GATConv with dropouts=0, no residual).
# --------------------------------------------------------------------------
def gat_conv_ref(x, w, attn_l, attn_r, bias, adj, *, num_heads, out_feats,
                 apply_elu, negative_slope=0.2):
    n = x.shape[0]
    z = jnp.dot(x, w, precision="highest").reshape(n, num_heads, out_feats)
    el = jnp.sum(z * attn_l[None], axis=-1)             # (N, H) source term
    er = jnp.sum(z * attn_r[None], axis=-1)             # (N, H) dest term
    e = er[:, None, :] + el[None, :, :]                 # (N_dst, N_src, H)
    e = jnp.where(e >= 0, e, negative_slope * e)
    mask = (adj > 0)[:, :, None]
    e = jnp.where(mask, e, -jnp.inf)
    m = jnp.max(e, axis=1, keepdims=True)
    p = jnp.where(mask, jnp.exp(e - m), 0.0)
    alpha = p / jnp.sum(p, axis=1, keepdims=True)
    out = jnp.einsum("vuh,uhd->vhd", alpha, z, precision="highest")
    out = out + bias[None]
    if apply_elu:
        out = jnp.where(out > 0, out, jnp.exp(out) - 1.0)
    return out.reshape(n, num_heads * out_feats)


# --------------------------------------------------------------------------
# Full GAT forward (num_layers hidden GATConv + ELU, then output GATConv,
# .flatten(1) between layers and .mean(1) over heads at the end).
# --------------------------------------------------------------------------
def gat_forward(x, adj, params, heads, hidden, num_classes, *, use_ref=False):
    num_layers = len(heads) - 1
    if use_ref:
        conv, adj_in = gat_conv_ref, adj
    else:
        conv = gat_conv_pallas
        adj_in = (adj > 0).astype(jnp.int8)      # int8 adjacency: 4x less DMA
    h = x
    for l in range(num_layers):
        w, al, ar, b = params[l]
        h = conv(h, w, al, ar, b, adj_in,
                 num_heads=heads[l], out_feats=hidden, apply_elu=True)
    w, al, ar, b = params[-1]
    out = conv(h, w, al, ar, b, adj_in,
               num_heads=heads[-1], out_feats=num_classes, apply_elu=False)
    n = out.shape[0]
    return out.reshape(n, heads[-1], num_classes).mean(axis=1)


def init_params(key, in_feats, hidden, num_classes, heads):
    """Deterministic synthetic weights matching DGL GATConv shapes."""
    params = []
    dims_in = [in_feats] + [hidden * heads[l] for l in range(len(heads) - 1)]
    dims_out = [hidden] * (len(heads) - 1) + [num_classes]
    for fin, fout, h in zip(dims_in, dims_out, heads):
        key, k1, k2, k3, k4 = jax.random.split(key, 5)
        scale = 1.0 / jnp.sqrt(jnp.float32(fin))
        w = jax.random.normal(k1, (fin, h * fout), jnp.float32) * scale
        al = jax.random.normal(k2, (h, fout), jnp.float32) * 0.1
        ar = jax.random.normal(k3, (h, fout), jnp.float32) * 0.1
        b = jax.random.normal(k4, (h, fout), jnp.float32) * 0.01
        params.append((w, al, ar, b))
    return params


if __name__ == "__main__":
    # Small synthetic problem: N=16 nodes, in_feats=8, hidden=16,
    # num_classes=4, num_layers=2, heads=[2, 2, 2].
    N, IN_FEATS, HIDDEN, NUM_CLASSES = 16, 8, 16, 4
    HEADS = [2, 2, 2]

    key = jax.random.PRNGKey(0)
    key, kx, ka = jax.random.split(key, 3)

    x = jax.random.normal(kx, (N, IN_FEATS), jnp.float32)

    # Random directed graph + self-loops (every node has >= 1 incoming edge,
    # consistent with allow_zero_in_degree handling).
    adj = (jax.random.uniform(ka, (N, N)) < 0.3).astype(jnp.float32)
    adj = jnp.maximum(adj, jnp.eye(N, dtype=jnp.float32))

    params = init_params(key, IN_FEATS, HIDDEN, NUM_CLASSES, HEADS)

    logits = gat_forward(x, adj, params, HEADS, HIDDEN, NUM_CLASSES)
    logits = jax.block_until_ready(logits)

    logits_ref = gat_forward(x, adj, params, HEADS, HIDDEN, NUM_CLASSES,
                             use_ref=True)
    logits_ref = jax.block_until_ready(logits_ref)

    # bf16 MXU operands (f32 accumulation) vs a full-f32 reference.
    if not jnp.allclose(logits, logits_ref, rtol=2e-2, atol=2e-2):
        raise AssertionError("Pallas GAT output mismatch vs JAX reference")

    print("KERNEL_OK")
</pallas_src>

<mosaic_0001>
module attributes {stable_mosaic.version = 11 : i64} {
  func.func @_proj_kernel(%arg0: i32, %arg1: memref<128x8xf32, #tpu.memory_space<vmem>>, %arg2: memref<8x32xf32, #tpu.memory_space<vmem>>, %arg3: memref<2x16xf32, #tpu.memory_space<vmem>>, %arg4: memref<2x16xf32, #tpu.memory_space<vmem>>, %arg5: memref<128x32xbf16, #tpu.memory_space<vmem>>, %arg6: memref<128x2xf32, #tpu.memory_space<vmem>>, %arg7: memref<128x2xf32, #tpu.memory_space<vmem>>) attributes {dimension_semantics = [#tpu.dimension_semantics<parallel>], iteration_bounds = array<i64: 1>, scalar_prefetch = 0 : i64, scratch_operands = 0 : i64, tpu.core_type = #tpu.core_type<tc>, window_params = [{transform_indices = @transform_0, window_bounds = array<i64: 128, 8>}, {pipeline_mode = #tpu.pipeline_mode<synchronous>, transform_indices = @transform_1, window_bounds = array<i64: 8, 32>}, {pipeline_mode = #tpu.pipeline_mode<synchronous>, transform_indices = @transform_2, window_bounds = array<i64: 2, 16>}, {pipeline_mode = #tpu.pipeline_mode<synchronous>, transform_indices = @transform_3, window_bounds = array<i64: 2, 16>}, {transform_indices = @transform_4, window_bounds = array<i64: 128, 32>}, {transform_indices = @transform_5, window_bounds = array<i64: 128, 2>}, {transform_indices = @transform_6, window_bounds = array<i64: 128, 2>}]} {
    %c0 = arith.constant 0 : index
    %c0_0 = arith.constant 0 : index
    %0 = vector.load %arg1[%c0, %c0_0] : memref<128x8xf32, #tpu.memory_space<vmem>>, vector<128x8xf32>
    %1 = arith.truncf %0 : vector<128x8xf32> to vector<128x8xbf16>
    %c0_1 = arith.constant 0 : index
    %c0_2 = arith.constant 0 : index
    %2 = vector.load %arg2[%c0_1, %c0_2] : memref<8x32xf32, #tpu.memory_space<vmem>>, vector<8x32xf32>
    %3 = arith.truncf %2 : vector<8x32xf32> to vector<8x32xbf16>
    %cst = arith.constant dense<0.000000e+00> : vector<128x32xf32>
    %4 = tpu.matmul %1, %3, %cst {dimension_numbers = #tpu.dot_dimension_numbers<[1], [0], [0], [1], [0, 0, 1, 1], [], []>} : vector<128x8xbf16>, vector<8x32xbf16>, vector<128x32xf32> -> vector<128x32xf32>
    %5 = arith.truncf %4 : vector<128x32xf32> to vector<128x32xbf16>
    %c0_3 = arith.constant 0 : index
    %c0_4 = arith.constant 0 : index
    %6 = vector.load %arg5[%c0_3, %c0_4] : memref<128x32xbf16, #tpu.memory_space<vmem>>, vector<128x32xbf16>
    tpu.vector_store %arg5[%c0_3, %c0_4], %5 {strides = array<i32>} : memref<128x32xbf16, #tpu.memory_space<vmem>>, vector<128x32xbf16>,
    %7 = vector.extract_strided_slice %4 {offsets = [0, 0], sizes = [128, 16], strides = [1, 1]} : vector<128x32xf32> to vector<128x16xf32>
    %c0_5 = arith.constant 0 : index
    %c0_6 = arith.constant 0 : index
    %8 = vector.load %arg3[%c0_5, %c0_6] : memref<2x16xf32, #tpu.memory_space<vmem>>, vector<1x16xf32>
    %c0_7 = arith.constant 0 : index
    %c0_8 = arith.constant 0 : index
    %9 = vector.load %arg4[%c0_7, %c0_8] : memref<2x16xf32, #tpu.memory_space<vmem>>, vector<1x16xf32>
    %10 = vector.broadcast %8 : vector<1x16xf32> to vector<128x16xf32>
    %11 = arith.mulf %7, %10 : vector<128x16xf32>
    %cst_9 = arith.constant dense<0.000000e+00> : vector<128xf32>
    %12 = vector.multi_reduction <add>, %11, %cst_9 [1] : vector<128x16xf32> to vector<128xf32>
    %13 = vector.shape_cast %12 : vector<128xf32> to vector<128x1xf32>
    %c0_10 = arith.constant 0 : index
    %c0_11 = arith.constant 0 : index
    %14 = vector.load %arg6[%c0_10, %c0_11] : memref<128x2xf32, #tpu.memory_space<vmem>>, vector<128x1xf32>
    tpu.vector_store %arg6[%c0_10, %c0_11], %13 {strides = array<i32>} : memref<128x2xf32, #tpu.memory_space<vmem>>, vector<128x1xf32>,
    %15 = vector.broadcast %9 : vector<1x16xf32> to vector<128x16xf32>
    %16 = arith.mulf %7, %15 : vector<128x16xf32>
    %cst_12 = arith.constant dense<0.000000e+00> : vector<128xf32>
    %17 = vector.multi_reduction <add>, %16, %cst_12 [1] : vector<128x16xf32> to vector<128xf32>
    %18 = vector.shape_cast %17 : vector<128xf32> to vector<128x1xf32>
    %c0_13 = arith.constant 0 : index
    %c0_14 = arith.constant 0 : index
    %19 = vector.load %arg7[%c0_13, %c0_14] : memref<128x2xf32, #tpu.memory_space<vmem>>, vector<128x1xf32>
    tpu.vector_store %arg7[%c0_13, %c0_14], %18 {strides = array<i32>} : memref<128x2xf32, #tpu.memory_space<vmem>>, vector<128x1xf32>,
    %20 = vector.extract_strided_slice %4 {offsets = [0, 16], sizes = [128, 16], strides = [1, 1]} : vector<128x32xf32> to vector<128x16xf32>
    %c1 = arith.constant 1 : index
    %c0_15 = arith.constant 0 : index
    %21 = vector.load %arg3[%c1, %c0_15] : memref<2x16xf32, #tpu.memory_space<vmem>>, vector<1x16xf32>
    %c1_16 = arith.constant 1 : index
    %c0_17 = arith.constant 0 : index
    %22 = vector.load %arg4[%c1_16, %c0_17] : memref<2x16xf32, #tpu.memory_space<vmem>>, vector<1x16xf32>
    %23 = vector.broadcast %21 : vector<1x16xf32> to vector<128x16xf32>
    %24 = arith.mulf %20, %23 : vector<128x16xf32>
    %cst_18 = arith.constant dense<0.000000e+00> : vector<128xf32>
    %25 = vector.multi_reduction <add>, %24, %cst_18 [1] : vector<128x16xf32> to vector<128xf32>
    %26 = vector.shape_cast %25 : vector<128xf32> to vector<128x1xf32>
    %c0_19 = arith.constant 0 : index
    %c1_20 = arith.constant 1 : index
    %27 = vector.load %arg6[%c0_19, %c1_20] : memref<128x2xf32, #tpu.memory_space<vmem>>, vector<128x1xf32>
    tpu.vector_store %arg6[%c0_19, %c1_20], %26 {strides = array<i32>} : memref<128x2xf32, #tpu.memory_space<vmem>>, vector<128x1xf32>,
    %28 = vector.broadcast %22 : vector<1x16xf32> to vector<128x16xf32>
    %29 = arith.mulf %20, %28 : vector<128x16xf32>
    %cst_21 = arith.constant dense<0.000000e+00> : vector<128xf32>
    %30 = vector.multi_reduction <add>, %29, %cst_21 [1] : vector<128x16xf32> to vector<128xf32>
    %31 = vector.shape_cast %30 : vector<128xf32> to vector<128x1xf32>
    %c0_22 = arith.constant 0 : index
    %c1_23 = arith.constant 1 : index
    %32 = vector.load %arg7[%c0_22, %c1_23] : memref<128x2xf32, #tpu.memory_space<vmem>>, vector<128x1xf32>
    tpu.vector_store %arg7[%c0_22, %c1_23], %31 {strides = array<i32>} : memref<128x2xf32, #tpu.memory_space<vmem>>, vector<128x1xf32>,
    return
  }
  func.func @transform_0(%arg0: i32) -> (i32, i32) {
    %c0_i32 = arith.constant 0 : i32
    %c0_i32_0 = arith.constant 0 : i32
    return %arg0, %c0_i32 : i32, i32
  }
  func.func @transform_1(%arg0: i32) -> (i32, i32) {
    %c0_i32 = arith.constant 0 : i32
    %c0_i32_0 = arith.constant 0 : i32
    %c0_i32_1 = arith.constant 0 : i32
    return %c0_i32, %c0_i32_0 : i32, i32
  }
  func.func @transform_2(%arg0: i32) -> (i32, i32) {
    %c0_i32 = arith.constant 0 : i32
    %c0_i32_0 = arith.constant 0 : i32
    %c0_i32_1 = arith.constant 0 : i32
    return %c0_i32, %c0_i32_0 : i32, i32
  }
  func.func @transform_3(%arg0: i32) -> (i32, i32) {
    %c0_i32 = arith.constant 0 : i32
    %c0_i32_0 = arith.constant 0 : i32
    %c0_i32_1 = arith.constant 0 : i32
    return %c0_i32, %c0_i32_0 : i32, i32
  }
  func.func @transform_4(%arg0: i32) -> (i32, i32) {
    %c0_i32 = arith.constant 0 : i32
    %c0_i32_0 = arith.constant 0 : i32
    return %arg0, %c0_i32 : i32, i32
  }
  func.func @transform_5(%arg0: i32) -> (i32, i32) {
    %c0_i32 = arith.constant 0 : i32
    %c0_i32_0 = arith.constant 0 : i32
    return %arg0, %c0_i32 : i32, i32
  }
  func.func @transform_6(%arg0: i32) -> (i32, i32) {
    %c0_i32 = arith.constant 0 : i32
    %c0_i32_0 = arith.constant 0 : i32
    return %arg0, %c0_i32 : i32, i32
  }
}

</mosaic_0001>

<llo_original>
// kernel: tpu_custom_call.1
$region0: #{tpu_custom_call.1}
  #allocation0 [shape = 'u32[]', space=smem, size = 0x4, offset = 0x4, fixed_abs, tag = 'smem constant byte address 0x4 - core index']
  #allocation1 [shape = 'u32[144,128]{1,0:T(1,128)}', space=vmem, size = 0x12000, scoped, tag = 'internal scratch']
  %s0 = inlined_call_operand.vmem [shape: f32[128,8], index: 0, kind: input, shape index: {}]
  %s1 = inlined_call_operand.vmem [shape: f32[8,32], index: 1, kind: input, shape index: {}]
  %s2 = inlined_call_operand.vmem [shape: f32[2,16], index: 2, kind: input, shape index: {}]
  %s3 = inlined_call_operand.vmem [shape: f32[2,16], index: 3, kind: input, shape index: {}]
  %s4 = inlined_call_operand.vmem [shape: bf16[128,32], index: 4, kind: output, shape index: {0}]
  %s5 = inlined_call_operand.vmem [shape: f32[128,2], index: 5, kind: output, shape index: {1}]
  %s6 = inlined_call_operand.vmem [shape: f32[128,2], index: 6, kind: output, shape index: {2}]
  %7 = xla_tuple %s4, %s5, %s6
  %s8 = sld [smem:[#allocation0]]
  $region42: #{tpu_custom_call.1} parent=0
    _
  %s10 = ssub.s32 1, %s8
  %s11 = scalar_select 0, %s10, %s8
  // Predicated region
  $region2: #{tpu_custom_call.1} parent=0 // pred_check
    _
  $region3: #{tpu_custom_call.1} parent=0 // pred_check_branch
    %13 = sbr.rel (0) target = $region5
  $region4: #{tpu_custom_call.1} parent=0 // pred_region
    _
  $region5: #{tpu_custom_call.1} parent=0 // pred_fallthru
    _
  // Predicated region
  $region6: #{tpu_custom_call.1} parent=0 // pred_check
    _
  $region7: #{tpu_custom_call.1} parent=0 // pred_check_branch
    %15 = sbr.rel (0) target = $region9
  $region8: #{tpu_custom_call.1} parent=0 // pred_region
    _
  $region9: #{tpu_custom_call.1} parent=0 // pred_fallthru
    _
  // Predicated region
  $region10: #{tpu_custom_call.1} parent=0 // pred_check
    _
  $region11: #{tpu_custom_call.1} parent=0 // pred_check_branch
    %17 = sbr.rel (0) target = $region13
  $region12: #{tpu_custom_call.1} parent=0 // pred_region
    _
  $region13: #{tpu_custom_call.1} parent=0 // pred_fallthru
    _
  // Predicated region
  $region14: #{tpu_custom_call.1} parent=0 // pred_check
    _
  $region15: #{tpu_custom_call.1} parent=0 // pred_check_branch
    %19 = sbr.rel (0) target = $region17
  $region16: #{tpu_custom_call.1} parent=0 // pred_region
    _
  $region17: #{tpu_custom_call.1} parent=0 // pred_fallthru
    _
  %v21 = vld [vmem:[%s0] sm:$0xff]
  %v22 = vld [vmem:[%s0 + $0x8] sm:$0xff]
  %v23 = vld [vmem:[%s0 + $0x10] sm:$0xff]
  %v24 = vld [vmem:[%s0 + $0x18] sm:$0xff]
  %v25 = vld [vmem:[%s0 + $0x20] sm:$0xff]
  %v26 = vld [vmem:[%s0 + $0x28] sm:$0xff]
  %v27 = vld [vmem:[%s0 + $0x30] sm:$0xff]
  %v28 = vld [vmem:[%s0 + $0x38] sm:$0xff]
  %v29 = vld [vmem:[%s0 + $0x40] sm:$0xff]
  %v30 = vld [vmem:[%s0 + $0x48] sm:$0xff]
  %v31 = vld [vmem:[%s0 + $0x50] sm:$0xff]
  %v32 = vld [vmem:[%s0 + $0x58] sm:$0xff]
  %v33 = vld [vmem:[%s0 + $0x60] sm:$0xff]
  %v34 = vld [vmem:[%s0 + $0x68] sm:$0xff]
  %v35 = vld [vmem:[%s0 + $0x70] sm:$0xff]
  %v36 = vld [vmem:[%s0 + $0x78] sm:$0xff]
  %v37 = vpack.c.bf16 %v22, %v21
  %v38 = vpack.c.bf16 %v24, %v23
  %v39 = vpack.c.bf16 %v26, %v25
  %v40 = vpack.c.bf16 %v28, %v27
  %v41 = vpack.c.bf16 %v30, %v29
  %v42 = vpack.c.bf16 %v32, %v31
  %v43 = vpack.c.bf16 %v34, %v33
  %v44 = vpack.c.bf16 %v36, %v35
  %v45 = vld [vmem:[%s1] sm:$0xff]
  %v46 = vpack.c.bf16 %v45, %v45
  %vm47 = vcmask 64512
  %v49 = vsel %vm47, %v37, 0
  %v52 = vsel %vm47, %v38, 0
  %v55 = vsel %vm47, %v39, 0
  %v58 = vsel %vm47, %v40, 0
  %v61 = vsel %vm47, %v41, 0
  %v64 = vsel %vm47, %v42, 0
  %v67 = vsel %vm47, %v43, 0
  %v70 = vsel %vm47, %v44, 0
  %vm72 = vcmask 1043456
  %v74 = vsel %vm72, %v46, 0
  %76 = vmatprep.subr.bf16.mxu0 0
  %77 = vmatpush1.bf16.msra.mxu0 %v74
  %78 = vmatprep.subr.bf16.mxu0 0
  %79 = vmatpush1.bf16.msra.mxu0 0
  %80 = vmatprep.subr.bf16.mxu0 0
  %81 = vmatpush1.bf16.msra.mxu0 0
  %82 = vmatprep.subr.bf16.mxu0 0
  %83 = vmatpush1.bf16.msra.mxu0 0
  %84 = vmatprep.subr.bf16.mxu0 0
  %85 = vmatpush1.bf16.msra.mxu0 0
  %86 = vmatprep.subr.bf16.mxu0 0
  %87 = vmatpush1.bf16.msra.mxu0 0
  %88 = vmatprep.subr.bf16.mxu0 0
  %89 = vmatpush1.bf16.msra.mxu0 0
  %90 = vmatprep.subr.bf16.mxu0 0
  %91 = vmatpush1.bf16.msra.mxu0 0
  %92 = vmatprep.subr.bf16.mxu0 0
  %93 = vmatpush1.bf16.msra.mxu0 0
  %94 = vmatprep.subr.bf16.mxu0 0
  %95 = vmatpush1.bf16.msra.mxu0 0
  %96 = vmatprep.subr.bf16.mxu0 0
  %97 = vmatpush1.bf16.msra.mxu0 0
  %98 = vmatprep.subr.bf16.mxu0 0
  %99 = vmatpush1.bf16.msra.mxu0 0
  %100 = vmatprep.subr.bf16.mxu0 0
  %101 = vmatpush1.bf16.msra.mxu0 0
  %102 = vmatprep.subr.bf16.mxu0 0
  %103 = vmatpush1.bf16.msra.mxu0 0
  %104 = vmatprep.subr.bf16.mxu0 0
  %105 = vmatpush1.bf16.msra.mxu0 0
  %106 = vmatprep.subr.bf16.mxu0 0
  %107 = vmatpush1.bf16.msra.mxu0 0
  %108 = vmatprep.mubr.bf16.mxu0 0
  %109 = vmatmul.mubr.bf16.gmra.mrb[0].mxu0 %v49
  %v110 = vpop.f32.mrb[0].mxu0
  %v111 = vadd.f32 0.0, %v110
  %v112 = vpop.f32.mrb[0].mxu0
  %v113 = vpop.f32.mrb[0].mxu0
  %v114 = vadd.f32 0.0, %v113
  %v115 = vpop.f32.mrb[0].mxu0
  %116 = vmatprep.mubr.bf16.mxu0 0
  %117 = vmatmul.mubr.bf16.gmra.mrb[0].mxu0 %v52
  %v118 = vpop.f32.mrb[0].mxu0
  %v119 = vadd.f32 0.0, %v118
  %v120 = vpop.f32.mrb[0].mxu0
  %v121 = vpop.f32.mrb[0].mxu0
  %v122 = vadd.f32 0.0, %v121
  %v123 = vpop.f32.mrb[0].mxu0
  %124 = vmatprep.mubr.bf16.mxu0 0
  %125 = vmatmul.mubr.bf16.gmra.mrb[0].mxu0 %v55
  %v126 = vpop.f32.mrb[0].mxu0
  %v127 = vadd.f32 0.0, %v126
  %v128 = vpop.f32.mrb[0].mxu0
  %v129 = vpop.f32.mrb[0].mxu0
  %v130 = vadd.f32 0.0, %v129
  %v131 = vpop.f32.mrb[0].mxu0
  %132 = vmatprep.mubr.bf16.mxu0 0
  %133 = vmatmul.mubr.bf16.gmra.mrb[0].mxu0 %v58
  %v134 = vpop.f32.mrb[0].mxu0
  %v135 = vadd.f32 0.0, %v134
  %v136 = vpop.f32.mrb[0].mxu0
  %v137 = vpop.f32.mrb[0].mxu0
  %v138 = vadd.f32 0.0, %v137
  %v139 = vpop.f32.mrb[0].mxu0
  %140 = vmatprep.mubr.bf16.mxu0 0
  %141 = vmatmul.mubr.bf16.gmra.mrb[0].mxu0 %v61
  %v142 = vpop.f32.mrb[0].mxu0
  %v143 = vadd.f32 0.0, %v142
  %v144 = vpop.f32.mrb[0].mxu0
  %v145 = vpop.f32.mrb[0].mxu0
  %v146 = vadd.f32 0.0, %v145
  %v147 = vpop.f32.mrb[0].mxu0
  %148 = vmatprep.mubr.bf16.mxu0 0
  %149 = vmatmul.mubr.bf16.gmra.mrb[0].mxu0 %v64
  %v150 = vpop.f32.mrb[0].mxu0
  %v151 = vadd.f32 0.0, %v150
  %v152 = vpop.f32.mrb[0].mxu0
  %v153 = vpop.f32.mrb[0].mxu0
  %v154 = vadd.f32 0.0, %v153
  %v155 = vpop.f32.mrb[0].mxu0
  %156 = vmatprep.mubr.bf16.mxu0 0
  %157 = vmatmul.mubr.bf16.gmra.mrb[0].mxu0 %v67
  %v158 = vpop.f32.mrb[0].mxu0
  %v159 = vadd.f32 0.0, %v158
  %v160 = vpop.f32.mrb[0].mxu0
  %v161 = vpop.f32.mrb[0].mxu0
  %v162 = vadd.f32 0.0, %v161
  %v163 = vpop.f32.mrb[0].mxu0
  %164 = vmatprep.mubr.bf16.mxu0 0
  %165 = vmatmul.mubr.bf16.gmra.mrb[0].mxu0 %v70
  %v166 = vpop.f32.mrb[0].mxu0
  %v167 = vadd.f32 0.0, %v166
  %v168 = vpop.f32.mrb[0].mxu0
  %v169 = vpop.f32.mrb[0].mxu0
  %v170 = vadd.f32 0.0, %v169
  %v171 = vpop.f32.mrb[0].mxu0
  %172 = vdwg.mxu0
  %v173 = vpack.c.bf16 %v114, %v111
  %v174 = vpack.c.bf16 %v122, %v119
  %v175 = vpack.c.bf16 %v130, %v127
  %v176 = vpack.c.bf16 %v138, %v135
  %v177 = vpack.c.bf16 %v146, %v143
  %v178 = vpack.c.bf16 %v154, %v151
  %v179 = vpack.c.bf16 %v162, %v159
  %v180 = vpack.c.bf16 %v170, %v167
  %v189 = vunpack.c.l.b16 %v173
  %v190 = vunpack.c.h.b16 %v173
  %v191 = vunpack.c.l.b16 %v174
  %v192 = vunpack.c.h.b16 %v174
  %v193 = vunpack.c.l.b16 %v175
  %v194 = vunpack.c.h.b16 %v175
  %v195 = vunpack.c.l.b16 %v176
  %v196 = vunpack.c.h.b16 %v176
  %v197 = vunpack.c.l.b16 %v177
  %v198 = vunpack.c.h.b16 %v177
  %v199 = vunpack.c.l.b16 %v178
  %v200 = vunpack.c.h.b16 %v178
  %v201 = vunpack.c.l.b16 %v179
  %v202 = vunpack.c.h.b16 %v179
  %v203 = vunpack.c.l.b16 %v180
  %v204 = vunpack.c.h.b16 %v180
  %v205 = vpack.c.b16 %v189, %v189
  %v206 = vpack.c.b16 %v190, %v190
  %v207 = vpack.c.b16 %v191, %v191
  %v208 = vpack.c.b16 %v192, %v192
  %v209 = vpack.c.b16 %v193, %v193
  %v210 = vpack.c.b16 %v194, %v194
  %v211 = vpack.c.b16 %v195, %v195
  %v212 = vpack.c.b16 %v196, %v196
  %v213 = vpack.c.b16 %v197, %v197
  %v214 = vpack.c.b16 %v198, %v198
  %v215 = vpack.c.b16 %v199, %v199
  %v216 = vpack.c.b16 %v200, %v200
  %v217 = vpack.c.b16 %v201, %v201
  %v218 = vpack.c.b16 %v202, %v202
  %v219 = vpack.c.b16 %v203, %v203
  %v220 = vpack.c.b16 %v204, %v204
  %vm237 = vcmask 257024
  %238 = vst.msk [vmem:[%s4] sm:$0xf] %vm237, %v205
  %239 = vst.msk [vmem:[%s4 + $0x4] sm:$0xf] %vm237, %v206
  %240 = vst.msk [vmem:[%s4 + $0x8] sm:$0xf] %vm237, %v207
  %241 = vst.msk [vmem:[%s4 + $0xc] sm:$0xf] %vm237, %v208
  %242 = vst.msk [vmem:[%s4 + $0x10] sm:$0xf] %vm237, %v209
  %243 = vst.msk [vmem:[%s4 + $0x14] sm:$0xf] %vm237, %v210
  %244 = vst.msk [vmem:[%s4 + $0x18] sm:$0xf] %vm237, %v211
  %245 = vst.msk [vmem:[%s4 + $0x1c] sm:$0xf] %vm237, %v212
  %246 = vst.msk [vmem:[%s4 + $0x20] sm:$0xf] %vm237, %v213
  %247 = vst.msk [vmem:[%s4 + $0x24] sm:$0xf] %vm237, %v214
  %248 = vst.msk [vmem:[%s4 + $0x28] sm:$0xf] %vm237, %v215
  %249 = vst.msk [vmem:[%s4 + $0x2c] sm:$0xf] %vm237, %v216
  %250 = vst.msk [vmem:[%s4 + $0x30] sm:$0xf] %vm237, %v217
  %251 = vst.msk [vmem:[%s4 + $0x34] sm:$0xf] %vm237, %v218
  %252 = vst.msk [vmem:[%s4 + $0x38] sm:$0xf] %vm237, %v219
  %253 = vst.msk [vmem:[%s4 + $0x3c] sm:$0xf] %vm237, %v220
  %v254 = vld [vmem:[%s2] sm:$0x1]
  %v255 = vld [vmem:[%s3] sm:$0x1]
  %v256 = vlaneseq
  %v257 = vshrl.u32 %v256, 7
  %v258 = vsub.s32 0, %v257
  %v259 = vrot.slane %v254, %v258
  %v260 = vmul.f32 %v111, %v259
  %v261 = vmul.f32 %v114, %v259
  %v262 = vmul.f32 %v119, %v259
  %v263 = vmul.f32 %v122, %v259
  %v264 = vmul.f32 %v127, %v259
  %v265 = vmul.f32 %v130, %v259
  %v266 = vmul.f32 %v135, %v259
  %v267 = vmul.f32 %v138, %v259
  %v268 = vmul.f32 %v143, %v259
  %v269 = vmul.f32 %v146, %v259
  %v270 = vmul.f32 %v151, %v259
  %v271 = vmul.f32 %v154, %v259
  %v272 = vmul.f32 %v159, %v259
  %v273 = vmul.f32 %v162, %v259
  %v274 = vmul.f32 %v167, %v259
  %v275 = vmul.f32 %v170, %v259
  %vm276 = vcmask 130048
  %v277 = vsel %vm276, %v260, 0.0
  %278 = vadd.xlane.f32.xlu0 %v277
  %v279 = vpop.xlane.xlu0 %278
  %v280 = vsel %vm276, %v261, 0.0
  %281 = vadd.xlane.f32.xlu0 %v280
  %v282 = vpop.xlane.xlu0 %281
  %v283 = vsel %vm276, %v262, 0.0
  %284 = vadd.xlane.f32.xlu0 %v283
  %v285 = vpop.xlane.xlu0 %284
  %v286 = vsel %vm276, %v263, 0.0
  %287 = vadd.xlane.f32.xlu0 %v286
  %v288 = vpop.xlane.xlu0 %287
  %v289 = vsel %vm276, %v264, 0.0
  %290 = vadd.xlane.f32.xlu0 %v289
  %v291 = vpop.xlane.xlu0 %290
  %v292 = vsel %vm276, %v265, 0.0
  %293 = vadd.xlane.f32.xlu0 %v292
  %v294 = vpop.xlane.xlu0 %293
  %v295 = vsel %vm276, %v266, 0.0
  %296 = vadd.xlane.f32.xlu0 %v295
  %v297 = vpop.xlane.xlu0 %296
  %v298 = vsel %vm276, %v267, 0.0
  %299 = vadd.xlane.f32.xlu0 %v298
  %v300 = vpop.xlane.xlu0 %299
  %v301 = vsel %vm276, %v268, 0.0
  %302 = vadd.xlane.f32.xlu0 %v301
  %v303 = vpop.xlane.xlu0 %302
  %v304 = vsel %vm276, %v269, 0.0
  %305 = vadd.xlane.f32.xlu0 %v304
  %v306 = vpop.xlane.xlu0 %305
  %v307 = vsel %vm276, %v270, 0.0
  %308 = vadd.xlane.f32.xlu0 %v307
  %v309 = vpop.xlane.xlu0 %308
  %v310 = vsel %vm276, %v271, 0.0
  %311 = vadd.xlane.f32.xlu0 %v310
  %v312 = vpop.xlane.xlu0 %311
  %v313 = vsel %vm276, %v272, 0.0
  %314 = vadd.xlane.f32.xlu0 %v313
  %v315 = vpop.xlane.xlu0 %314
  %v316 = vsel %vm276, %v273, 0.0
  %317 = vadd.xlane.f32.xlu0 %v316
  %v318 = vpop.xlane.xlu0 %317
  %v319 = vsel %vm276, %v274, 0.0
  %320 = vadd.xlane.f32.xlu0 %v319
  %v321 = vpop.xlane.xlu0 %320
  %v322 = vsel %vm276, %v275, 0.0
  %323 = vadd.xlane.f32.xlu0 %v322
  %v324 = vpop.xlane.xlu0 %323
  %vm325 = vcmask 7168
  %326 = vst.msk [vmem:[%s5] sm:$0xff] %vm325, %v279
  %327 = vst.msk [vmem:[%s5 + $0x8] sm:$0xff] %vm325, %v282
  %328 = vst.msk [vmem:[%s5 + $0x10] sm:$0xff] %vm325, %v285
  %329 = vst.msk [vmem:[%s5 + $0x18] sm:$0xff] %vm325, %v288
  %330 = vst.msk [vmem:[%s5 + $0x20] sm:$0xff] %vm325, %v291
  %331 = vst.msk [vmem:[%s5 + $0x28] sm:$0xff] %vm325, %v294
  %332 = vst.msk [vmem:[%s5 + $0x30] sm:$0xff] %vm325, %v297
  %333 = vst.msk [vmem:[%s5 + $0x38] sm:$0xff] %vm325, %v300
  %334 = vst.msk [vmem:[%s5 + $0x40] sm:$0xff] %vm325, %v303
  %335 = vst.msk [vmem:[%s5 + $0x48] sm:$0xff] %vm325, %v306
  %336 = vst.msk [vmem:[%s5 + $0x50] sm:$0xff] %vm325, %v309
  %337 = vst.msk [vmem:[%s5 + $0x58] sm:$0xff] %vm325, %v312
  %338 = vst.msk [vmem:[%s5 + $0x60] sm:$0xff] %vm325, %v315
  %339 = vst.msk [vmem:[%s5 + $0x68] sm:$0xff] %vm325, %v318
  %340 = vst.msk [vmem:[%s5 + $0x70] sm:$0xff] %vm325, %v321
  %341 = vst.msk [vmem:[%s5 + $0x78] sm:$0xff] %vm325, %v324
  %v342 = vlaneseq
  %v343 = vshrl.u32 %v342, 7
  %v344 = vsub.s32 0, %v343
  %v345 = vrot.slane %v255, %v344
  %v346 = vmul.f32 %v111, %v345
  %v347 = vmul.f32 %v114, %v345
  %v348 = vmul.f32 %v119, %v345
  %v349 = vmul.f32 %v122, %v345
  %v350 = vmul.f32 %v127, %v345
  %v351 = vmul.f32 %v130, %v345
  %v352 = vmul.f32 %v135, %v345
  %v353 = vmul.f32 %v138, %v345
  %v354 = vmul.f32 %v143, %v345
  %v355 = vmul.f32 %v146, %v345
  %v356 = vmul.f32 %v151, %v345
  %v357 = vmul.f32 %v154, %v345
  %v358 = vmul.f32 %v159, %v345
  %v359 = vmul.f32 %v162, %v345
  %v360 = vmul.f32 %v167, %v345
  %v361 = vmul.f32 %v170, %v345
  %v362 = vsel %vm276, %v346, 0.0
  %363 = vadd.xlane.f32.xlu0 %v362
  %v364 = vpop.xlane.xlu0 %363
  %v365 = vsel %vm276, %v347, 0.0
  %366 = vadd.xlane.f32.xlu0 %v365
  %v367 = vpop.xlane.xlu0 %366
  %v368 = vsel %vm276, %v348, 0.0
  %369 = vadd.xlane.f32.xlu0 %v368
  %v370 = vpop.xlane.xlu0 %369
  %v371 = vsel %vm276, %v349, 0.0
  %372 = vadd.xlane.f32.xlu0 %v371
  %v373 = vpop.xlane.xlu0 %372
  %v374 = vsel %vm276, %v350, 0.0
  %375 = vadd.xlane.f32.xlu0 %v374
  %v376 = vpop.xlane.xlu0 %375
  %v377 = vsel %vm276, %v351, 0.0
  %378 = vadd.xlane.f32.xlu0 %v377
  %v379 = vpop.xlane.xlu0 %378
  %v380 = vsel %vm276, %v352, 0.0
  %381 = vadd.xlane.f32.xlu0 %v380
  %v382 = vpop.xlane.xlu0 %381
  %v383 = vsel %vm276, %v353, 0.0
  %384 = vadd.xlane.f32.xlu0 %v383
  %v385 = vpop.xlane.xlu0 %384
  %v386 = vsel %vm276, %v354, 0.0
  %387 = vadd.xlane.f32.xlu0 %v386
  %v388 = vpop.xlane.xlu0 %387
  %v389 = vsel %vm276, %v355, 0.0
  %390 = vadd.xlane.f32.xlu0 %v389
  %v391 = vpop.xlane.xlu0 %390
  %v392 = vsel %vm276, %v356, 0.0
  %393 = vadd.xlane.f32.xlu0 %v392
  %v394 = vpop.xlane.xlu0 %393
  %v395 = vsel %vm276, %v357, 0.0
  %396 = vadd.xlane.f32.xlu0 %v395
  %v397 = vpop.xlane.xlu0 %396
  %v398 = vsel %vm276, %v358, 0.0
  %399 = vadd.xlane.f32.xlu0 %v398
  %v400 = vpop.xlane.xlu0 %399
  %v401 = vsel %vm276, %v359, 0.0
  %402 = vadd.xlane.f32.xlu0 %v401
  %v403 = vpop.xlane.xlu0 %402
  %v404 = vsel %vm276, %v360, 0.0
  %405 = vadd.xlane.f32.xlu0 %v404
  %v406 = vpop.xlane.xlu0 %405
  %v407 = vsel %vm276, %v361, 0.0
  %408 = vadd.xlane.f32.xlu0 %v407
  %v409 = vpop.xlane.xlu0 %408
  %410 = vst.msk [vmem:[%s6] sm:$0xff] %vm325, %v364
  %411 = vst.msk [vmem:[%s6 + $0x8] sm:$0xff] %vm325, %v367
  %412 = vst.msk [vmem:[%s6 + $0x10] sm:$0xff] %vm325, %v370
  %413 = vst.msk [vmem:[%s6 + $0x18] sm:$0xff] %vm325, %v373
  %414 = vst.msk [vmem:[%s6 + $0x20] sm:$0xff] %vm325, %v376
  %415 = vst.msk [vmem:[%s6 + $0x28] sm:$0xff] %vm325, %v379
  %416 = vst.msk [vmem:[%s6 + $0x30] sm:$0xff] %vm325, %v382
  %417 = vst.msk [vmem:[%s6 + $0x38] sm:$0xff] %vm325, %v385
  %418 = vst.msk [vmem:[%s6 + $0x40] sm:$0xff] %vm325, %v388
  %419 = vst.msk [vmem:[%s6 + $0x48] sm:$0xff] %vm325, %v391
  %420 = vst.msk [vmem:[%s6 + $0x50] sm:$0xff] %vm325, %v394
  %421 = vst.msk [vmem:[%s6 + $0x58] sm:$0xff] %vm325, %v397
  %422 = vst.msk [vmem:[%s6 + $0x60] sm:$0xff] %vm325, %v400
  %423 = vst.msk [vmem:[%s6 + $0x68] sm:$0xff] %vm325, %v403
  %424 = vst.msk [vmem:[%s6 + $0x70] sm:$0xff] %vm325, %v406
  %425 = vst.msk [vmem:[%s6 + $0x78] sm:$0xff] %vm325, %v409
  %v426 = vld [vmem:[%s2 + $0x1] sm:$0x1]
  %v427 = vld [vmem:[%s3 + $0x1] sm:$0x1]
  %v428 = vlaneseq
  %v429 = vshrl.u32 %v428, 7
  %v430 = vsub.s32 0, %v429
  %v431 = vrot.slane %v426, %v430
  %433 = vrot.lane.b32.xlu0 %v431, 16
  %v434 = vpop.permute.xlu0 %433
  %v436 = vmul.f32 %v111, %v434
  %v437 = vmul.f32 %v114, %v434
  %v438 = vmul.f32 %v119, %v434
  %v439 = vmul.f32 %v122, %v434
  %v440 = vmul.f32 %v127, %v434
  %v441 = vmul.f32 %v130, %v434
  %v442 = vmul.f32 %v135, %v434
  %v443 = vmul.f32 %v138, %v434
  %v444 = vmul.f32 %v143, %v434
  %v445 = vmul.f32 %v146, %v434
  %v446 = vmul.f32 %v151, %v434
  %v447 = vmul.f32 %v154, %v434
  %v448 = vmul.f32 %v159, %v434
  %v449 = vmul.f32 %v162, %v434
  %v450 = vmul.f32 %v167, %v434
  %v451 = vmul.f32 %v170, %v434
  %468 = vrot.lane.b32.xlu0 %v436, 112
  %v469 = vpop.permute.xlu0 %468
  %470 = vrot.lane.b32.xlu0 %v437, 112
  %v471 = vpop.permute.xlu0 %470
  %472 = vrot.lane.b32.xlu0 %v438, 112
  %v473 = vpop.permute.xlu0 %472
  %474 = vrot.lane.b32.xlu0 %v439, 112
  %v475 = vpop.permute.xlu0 %474
  %476 = vrot.lane.b32.xlu0 %v440, 112
  %v477 = vpop.permute.xlu0 %476
  %478 = vrot.lane.b32.xlu0 %v441, 112
  %v479 = vpop.permute.xlu0 %478
  %480 = vrot.lane.b32.xlu0 %v442, 112
  %v481 = vpop.permute.xlu0 %480
  %482 = vrot.lane.b32.xlu0 %v443, 112
  %v483 = vpop.permute.xlu0 %482
  %484 = vrot.lane.b32.xlu0 %v444, 112
  %v485 = vpop.permute.xlu0 %484
  %486 = vrot.lane.b32.xlu0 %v445, 112
  %v487 = vpop.permute.xlu0 %486
  %488 = vrot.lane.b32.xlu0 %v446, 112
  %v489 = vpop.permute.xlu0 %488
  %490 = vrot.lane.b32.xlu0 %v447, 112
  %v491 = vpop.permute.xlu0 %490
  %492 = vrot.lane.b32.xlu0 %v448, 112
  %v493 = vpop.permute.xlu0 %492
  %494 = vrot.lane.b32.xlu0 %v449, 112
  %v495 = vpop.permute.xlu0 %494
  %496 = vrot.lane.b32.xlu0 %v450, 112
  %v497 = vpop.permute.xlu0 %496
  %498 = vrot.lane.b32.xlu0 %v451, 112
  %v499 = vpop.permute.xlu0 %498
  %v516 = vsel %vm276, %v469, 0.0
  %517 = vadd.xlane.f32.xlu0 %v516
  %v518 = vpop.xlane.xlu0 %517
  %v519 = vsel %vm276, %v471, 0.0
  %520 = vadd.xlane.f32.xlu0 %v519
  %v521 = vpop.xlane.xlu0 %520
  %v522 = vsel %vm276, %v473, 0.0
  %523 = vadd.xlane.f32.xlu0 %v522
  %v524 = vpop.xlane.xlu0 %523
  %v525 = vsel %vm276, %v475, 0.0
  %526 = vadd.xlane.f32.xlu0 %v525
  %v527 = vpop.xlane.xlu0 %526
  %v528 = vsel %vm276, %v477, 0.0
  %529 = vadd.xlane.f32.xlu0 %v528
  %v530 = vpop.xlane.xlu0 %529
  %v531 = vsel %vm276, %v479, 0.0
  %532 = vadd.xlane.f32.xlu0 %v531
  %v533 = vpop.xlane.xlu0 %532
  %v534 = vsel %vm276, %v481, 0.0
  %535 = vadd.xlane.f32.xlu0 %v534
  %v536 = vpop.xlane.xlu0 %535
  %v537 = vsel %vm276, %v483, 0.0
  %538 = vadd.xlane.f32.xlu0 %v537
  %v539 = vpop.xlane.xlu0 %538
  %v540 = vsel %vm276, %v485, 0.0
  %541 = vadd.xlane.f32.xlu0 %v540
  %v542 = vpop.xlane.xlu0 %541
  %v543 = vsel %vm276, %v487, 0.0
  %544 = vadd.xlane.f32.xlu0 %v543
  %v545 = vpop.xlane.xlu0 %544
  %v546 = vsel %vm276, %v489, 0.0
  %547 = vadd.xlane.f32.xlu0 %v546
  %v548 = vpop.xlane.xlu0 %547
  %v549 = vsel %vm276, %v491, 0.0
  %550 = vadd.xlane.f32.xlu0 %v549
  %v551 = vpop.xlane.xlu0 %550
  %v552 = vsel %vm276, %v493, 0.0
  %553 = vadd.xlane.f32.xlu0 %v552
  %v554 = vpop.xlane.xlu0 %553
  %v555 = vsel %vm276, %v495, 0.0
  %556 = vadd.xlane.f32.xlu0 %v555
  %v557 = vpop.xlane.xlu0 %556
  %v558 = vsel %vm276, %v497, 0.0
  %559 = vadd.xlane.f32.xlu0 %v558
  %v560 = vpop.xlane.xlu0 %559
  %v561 = vsel %vm276, %v499, 0.0
  %562 = vadd.xlane.f32.xlu0 %v561
  %v563 = vpop.xlane.xlu0 %562
  %vm564 = vcmask 15368
  %565 = vst.msk [vmem:[%s5] sm:$0xff] %vm564, %v518
  %566 = vst.msk [vmem:[%s5 + $0x8] sm:$0xff] %vm564, %v521
  %567 = vst.msk [vmem:[%s5 + $0x10] sm:$0xff] %vm564, %v524
  %568 = vst.msk [vmem:[%s5 + $0x18] sm:$0xff] %vm564, %v527
  %569 = vst.msk [vmem:[%s5 + $0x20] sm:$0xff] %vm564, %v530
  %570 = vst.msk [vmem:[%s5 + $0x28] sm:$0xff] %vm564, %v533
  %571 = vst.msk [vmem:[%s5 + $0x30] sm:$0xff] %vm564, %v536
  %572 = vst.msk [vmem:[%s5 + $0x38] sm:$0xff] %vm564, %v539
  %573 = vst.msk [vmem:[%s5 + $0x40] sm:$0xff] %vm564, %v542
  %574 = vst.msk [vmem:[%s5 + $0x48] sm:$0xff] %vm564, %v545
  %575 = vst.msk [vmem:[%s5 + $0x50] sm:$0xff] %vm564, %v548
  %576 = vst.msk [vmem:[%s5 + $0x58] sm:$0xff] %vm564, %v551
  %577 = vst.msk [vmem:[%s5 + $0x60] sm:$0xff] %vm564, %v554
  %578 = vst.msk [vmem:[%s5 + $0x68] sm:$0xff] %vm564, %v557
  %579 = vst.msk [vmem:[%s5 + $0x70] sm:$0xff] %vm564, %v560
  %580 = vst.msk [vmem:[%s5 + $0x78] sm:$0xff] %vm564, %v563
  %v581 = vlaneseq
  %v582 = vshrl.u32 %v581, 7
  %v583 = vsub.s32 0, %v582
  %v584 = vrot.slane %v427, %v583
  %586 = vrot.lane.b32.xlu0 %v584, 16
  %v587 = vpop.permute.xlu0 %586
  %v589 = vmul.f32 %v111, %v587
  %v590 = vmul.f32 %v114, %v587
  %v591 = vmul.f32 %v119, %v587
  %v592 = vmul.f32 %v122, %v587
  %v593 = vmul.f32 %v127, %v587
  %v594 = vmul.f32 %v130, %v587
  %v595 = vmul.f32 %v135, %v587
  %v596 = vmul.f32 %v138, %v587
  %v597 = vmul.f32 %v143, %v587
  %v598 = vmul.f32 %v146, %v587
  %v599 = vmul.f32 %v151, %v587
  %v600 = vmul.f32 %v154, %v587
  %v601 = vmul.f32 %v159, %v587
  %v602 = vmul.f32 %v162, %v587
  %v603 = vmul.f32 %v167, %v587
  %v604 = vmul.f32 %v170, %v587
  %621 = vrot.lane.b32.xlu0 %v589, 112
  %v622 = vpop.permute.xlu0 %621
  %623 = vrot.lane.b32.xlu0 %v590, 112
  %v624 = vpop.permute.xlu0 %623
  %625 = vrot.lane.b32.xlu0 %v591, 112
  %v626 = vpop.permute.xlu0 %625
  %627 = vrot.lane.b32.xlu0 %v592, 112
  %v628 = vpop.permute.xlu0 %627
  %629 = vrot.lane.b32.xlu0 %v593, 112
  %v630 = vpop.permute.xlu0 %629
  %631 = vrot.lane.b32.xlu0 %v594, 112
  %v632 = vpop.permute.xlu0 %631
  %633 = vrot.lane.b32.xlu0 %v595, 112
  %v634 = vpop.permute.xlu0 %633
  %635 = vrot.lane.b32.xlu0 %v596, 112
  %v636 = vpop.permute.xlu0 %635
  %637 = vrot.lane.b32.xlu0 %v597, 112
  %v638 = vpop.permute.xlu0 %637
  %639 = vrot.lane.b32.xlu0 %v598, 112
  %v640 = vpop.permute.xlu0 %639
  %641 = vrot.lane.b32.xlu0 %v599, 112
  %v642 = vpop.permute.xlu0 %641
  %643 = vrot.lane.b32.xlu0 %v600, 112
  %v644 = vpop.permute.xlu0 %643
  %645 = vrot.lane.b32.xlu0 %v601, 112
  %v646 = vpop.permute.xlu0 %645
  %647 = vrot.lane.b32.xlu0 %v602, 112
  %v648 = vpop.permute.xlu0 %647
  %649 = vrot.lane.b32.xlu0 %v603, 112
  %v650 = vpop.permute.xlu0 %649
  %651 = vrot.lane.b32.xlu0 %v604, 112
  %v652 = vpop.permute.xlu0 %651
  %v669 = vsel %vm276, %v622, 0.0
  %670 = vadd.xlane.f32.xlu0 %v669
  %v671 = vpop.xlane.xlu0 %670
  %v672 = vsel %vm276, %v624, 0.0
  %673 = vadd.xlane.f32.xlu0 %v672
  %v674 = vpop.xlane.xlu0 %673
  %v675 = vsel %vm276, %v626, 0.0
  %676 = vadd.xlane.f32.xlu0 %v675
  %v677 = vpop.xlane.xlu0 %676
  %v678 = vsel %vm276, %v628, 0.0
  %679 = vadd.xlane.f32.xlu0 %v678
  %v680 = vpop.xlane.xlu0 %679
  %v681 = vsel %vm276, %v630, 0.0
  %682 = vadd.xlane.f32.xlu0 %v681
  %v683 = vpop.xlane.xlu0 %682
  %v684 = vsel %vm276, %v632, 0.0
  %685 = vadd.xlane.f32.xlu0 %v684
  %v686 = vpop.xlane.xlu0 %685
  %v687 = vsel %vm276, %v634, 0.0
  %688 = vadd.xlane.f32.xlu0 %v687
  %v689 = vpop.xlane.xlu0 %688
  %v690 = vsel %vm276, %v636, 0.0
  %691 = vadd.xlane.f32.xlu0 %v690
  %v692 = vpop.xlane.xlu0 %691
  %v693 = vsel %vm276, %v638, 0.0
  %694 = vadd.xlane.f32.xlu0 %v693
  %v695 = vpop.xlane.xlu0 %694
  %v696 = vsel %vm276, %v640, 0.0
  %697 = vadd.xlane.f32.xlu0 %v696
  %v698 = vpop.xlane.xlu0 %697
  %v699 = vsel %vm276, %v642, 0.0
  %700 = vadd.xlane.f32.xlu0 %v699
  %v701 = vpop.xlane.xlu0 %700
  %v702 = vsel %vm276, %v644, 0.0
  %703 = vadd.xlane.f32.xlu0 %v702
  %v704 = vpop.xlane.xlu0 %703
  %v705 = vsel %vm276, %v646, 0.0
  %706 = vadd.xlane.f32.xlu0 %v705
  %v707 = vpop.xlane.xlu0 %706
  %v708 = vsel %vm276, %v648, 0.0
  %709 = vadd.xlane.f32.xlu0 %v708
  %v710 = vpop.xlane.xlu0 %709
  %v711 = vsel %vm276, %v650, 0.0
  %712 = vadd.xlane.f32.xlu0 %v711
  %v713 = vpop.xlane.xlu0 %712
  %v714 = vsel %vm276, %v652, 0.0
  %715 = vadd.xlane.f32.xlu0 %v714
  %v716 = vpop.xlane.xlu0 %715
  %717 = vst.msk [vmem:[%s6] sm:$0xff] %vm564, %v671
  %718 = vst.msk [vmem:[%s6 + $0x8] sm:$0xff] %vm564, %v674
  %719 = vst.msk [vmem:[%s6 + $0x10] sm:$0xff] %vm564, %v677
  %720 = vst.msk [vmem:[%s6 + $0x18] sm:$0xff] %vm564, %v680
  %721 = vst.msk [vmem:[%s6 + $0x20] sm:$0xff] %vm564, %v683
  %722 = vst.msk [vmem:[%s6 + $0x28] sm:$0xff] %vm564, %v686
  %723 = vst.msk [vmem:[%s6 + $0x30] sm:$0xff] %vm564, %v689
  %724 = vst.msk [vmem:[%s6 + $0x38] sm:$0xff] %vm564, %v692
  %725 = vst.msk [vmem:[%s6 + $0x40] sm:$0xff] %vm564, %v695
  %726 = vst.msk [vmem:[%s6 + $0x48] sm:$0xff] %vm564, %v698
  %727 = vst.msk [vmem:[%s6 + $0x50] sm:$0xff] %vm564, %v701
  %728 = vst.msk [vmem:[%s6 + $0x58] sm:$0xff] %vm564, %v704
  %729 = vst.msk [vmem:[%s6 + $0x60] sm:$0xff] %vm564, %v707
  %730 = vst.msk [vmem:[%s6 + $0x68] sm:$0xff] %vm564, %v710
  %731 = vst.msk [vmem:[%s6 + $0x70] sm:$0xff] %vm564, %v713
  %732 = vst.msk [vmem:[%s6 + $0x78] sm:$0xff] %vm564, %v716
  // Predicated region
  $region18: #{tpu_custom_call.1} parent=0 // pred_check
    _
  $region19: #{tpu_custom_call.1} parent=0 // pred_check_branch
    %734 = sbr.rel (0) target = $region21
  $region20: #{tpu_custom_call.1} parent=0 // pred_region
    _
  $region21: #{tpu_custom_call.1} parent=0 // pred_fallthru
    _
  // Predicated region
  $region22: #{tpu_custom_call.1} parent=0 // pred_check
    _
  $region23: #{tpu_custom_call.1} parent=0 // pred_check_branch
    %736 = sbr.rel (0) target = $region25
  $region24: #{tpu_custom_call.1} parent=0 // pred_region
    _
  $region25: #{tpu_custom_call.1} parent=0 // pred_fallthru
    _
  // Predicated region
  $region26: #{tpu_custom_call.1} parent=0 // pred_check
    _
  $region27: #{tpu_custom_call.1} parent=0 // pred_check_branch
    %738 = sbr.rel (0) target = $region29
  $region28: #{tpu_custom_call.1} parent=0 // pred_region
    _
  $region29: #{tpu_custom_call.1} parent=0 // pred_fallthru
    _
  // Predicated region
  $region30: #{tpu_custom_call.1} parent=0 // pred_check
    _
  $region31: #{tpu_custom_call.1} parent=0 // pred_check_branch
    %740 = sbr.rel (0) target = $region33
  $region32: #{tpu_custom_call.1} parent=0 // pred_region
    _
  $region33: #{tpu_custom_call.1} parent=0 // pred_fallthru
    _
  // Predicated region
  $region34: #{tpu_custom_call.1} parent=0 // pred_check
    _
  $region35: #{tpu_custom_call.1} parent=0 // pred_check_branch
    %742 = sbr.rel (0) target = $region37
  $region36: #{tpu_custom_call.1} parent=0 // pred_region
    _
  $region37: #{tpu_custom_call.1} parent=0 // pred_fallthru
    _
  // Predicated region
  $region38: #{tpu_custom_call.1} parent=0 // pred_check
    _
  $region39: #{tpu_custom_call.1} parent=0 // pred_check_branch
    %744 = sbr.rel (0) target = $region41
  $region40: #{tpu_custom_call.1} parent=0 // pred_region
    _
  $region41: #{tpu_custom_call.1} parent=0 // pred_fallthru
    _

</llo_original>
